<compile_context>
chip_gen: v5e
topology: v5e:2x2
jax: 0.10.0
libtpu: 0.0.40
codegen_flags: <defaults>
</compile_context>

<pallas_src>
import jax
import jax.numpy as jnp
from jax.experimental import pallas as pl
from jax.experimental.pallas import tpu as pltpu

NU_MAX = 2.0   # synthetic stand-in for env.nu_max
IN_DIM = 3
OUT_DIM = 2
LANE = 128
TILE_N_MAX = 8192   # rows (lanes) per grid step


def _round_up(x, m):
    return ((x + m - 1) // m) * m


# ---------------------------------------------------------------------------
# Kernel
# ---------------------------------------------------------------------------
def make_pi_ann_kernel(num_hidden):
    """Fused two-head MLP in transposed (feature-on-sublane, row-on-lane) layout."""

    def kernel(x_ref, *refs):
        if num_hidden > 0:
            w_in_ref, w_hid_ref, w_out_ref, b_hid_ref, epi_ref, out_ref = refs
        else:
            w_in_ref, w_out_ref, b_hid_ref, epi_ref, out_ref = refs
            w_hid_ref = None

        x = x_ref[...]                                   # (IN_DIM, TILE_N)
        w_in = w_in_ref[...]                             # (2H, IN_DIM)

        # Input layer on the VPU: 3 broadcast FMAs. K=3 on the MXU pads to
        # 128/256 and adds a serial MXU result-FIFO trip before the hidden
        # matmul; the VPU has slack at these sizes.
        h = w_in[:, 0:1] * x[0:1, :]                     # (2H, TILE_N)
        for d in range(1, IN_DIM):
            h = h + w_in[:, d:d + 1] * x[d:d + 1, :]
        h = jnp.maximum(h + b_hid_ref[:, 0:1], 0.0)

        # hidden layers (block-diagonal fused weights), static unrolled loop
        for l in range(num_hidden):
            h = jnp.dot(w_hid_ref[l], h, preferred_element_type=jnp.float32)
            h = jnp.maximum(h + b_hid_ref[:, l + 1:l + 2], 0.0)

        # output layer: (2, 2H) @ (2H, TILE_N) -> (2, TILE_N)
        z = jnp.dot(w_out_ref[...], h, preferred_element_type=jnp.float32)

        # Fused epilogue, single tanh over the (2, TILE_N) tile:
        #   row 0 (nu)  : nu_max * tanh(z + b)
        #   row 1 (prob): sigmoid(z + b) = 0.5 * (tanh((z + b)/2) + 1)
        # epi columns: [b_out, pre_scale, post_scale, post_offset]
        z = (z + epi_ref[:, 0:1]) * epi_ref[:, 1:2]
        out_ref[...] = epi_ref[:, 2:3] * jnp.tanh(z) + epi_ref[:, 3:4]

    return kernel


# ---------------------------------------------------------------------------
# Parameter init (PyTorch-Linear-style) + fused packing
# ---------------------------------------------------------------------------
def init_head_params(key, nNodes, nLayers):
    """U(-1/sqrt(fan_in), 1/sqrt(fan_in)); flat [w_in,b_in,(w_h,b_h)*,(w_out,b_out)]."""
    num_hidden = nLayers - 1
    dims = [IN_DIM] + [nNodes] * nLayers + [1]
    params = []
    for i in range(len(dims) - 1):
        fan_in, fan_out = dims[i], dims[i + 1]
        key, kw, kb = jax.random.split(key, 3)
        bound = 1.0 / jnp.sqrt(fan_in)
        w = jax.random.uniform(kw, (fan_in, fan_out), jnp.float32, -bound, bound)
        b = jax.random.uniform(kb, (1, fan_out), jnp.float32, -bound, bound)
        params += [w, b]
    assert len(params) == 4 + 2 * num_hidden
    return params


def pack_pi_ann_params(nu_params, prob_params, nNodes, nLayers, nu_max=NU_MAX):
    """Fuse the two heads into one transposed weight chain (done once, host/trace side)."""
    H = nNodes
    num_hidden = nLayers - 1
    f32 = jnp.float32

    # input weights: (2H, 3)
    w_in_t = jnp.concatenate([nu_params[0].T, prob_params[0].T], axis=0).astype(f32)

    # hidden weights: block diagonal, stacked -> (num_hidden, 2H, 2H)
    # (Only efficient while 2H fits one MXU tile: 128 on v5e, 256 on v6e/v7x.)
    w_hid = None
    if num_hidden > 0:
        blocks = []
        z = jnp.zeros((H, H), f32)
        for l in range(num_hidden):
            w_nu_t = nu_params[2 + 2 * l].T
            w_pr_t = prob_params[2 + 2 * l].T
            top = jnp.concatenate([w_nu_t, z], axis=1)
            bot = jnp.concatenate([z, w_pr_t], axis=1)
            blocks.append(jnp.concatenate([top, bot], axis=0))
        w_hid = jnp.stack(blocks).astype(f32)

    # output weights: (2, 2H)  (row 0 = nu head, row 1 = prob head)
    w_out_nu_t = nu_params[2 + 2 * num_hidden].T        # (1, H)
    w_out_pr_t = prob_params[2 + 2 * num_hidden].T
    zr = jnp.zeros((1, H), f32)
    w_out_t = jnp.concatenate(
        [jnp.concatenate([w_out_nu_t, zr], axis=1),
         jnp.concatenate([zr, w_out_pr_t], axis=1)], axis=0).astype(f32)

    # biases for input + hidden layers as columns: (2H, nLayers)
    b_cols = [jnp.concatenate([nu_params[1].reshape(-1),
                               prob_params[1].reshape(-1)])]
    for l in range(num_hidden):
        b_cols.append(jnp.concatenate([nu_params[3 + 2 * l].reshape(-1),
                                       prob_params[3 + 2 * l].reshape(-1)]))
    b_hid = jnp.stack(b_cols, axis=1).astype(f32)        # (2H, nLayers)

    # epilogue slab (2, 4): columns = [b_out, pre_scale, post_scale, post_offset]
    #   nu   row: nu_max*tanh(z+b)            -> [b_nu, 1.0, nu_max, 0.0]
    #   prob row: 0.5*(tanh(0.5*(z+b)) + 1)   -> [b_pr, 0.5, 0.5,    0.5]
    b_out_nu = jnp.reshape(nu_params[3 + 2 * num_hidden], ())
    b_out_pr = jnp.reshape(prob_params[3 + 2 * num_hidden], ())
    one = jnp.float32(1.0)
    half = jnp.float32(0.5)
    zero = jnp.float32(0.0)
    epi = jnp.stack([
        jnp.stack([b_out_nu, one, jnp.float32(nu_max), zero]),
        jnp.stack([b_out_pr, half, half, half]),
    ]).astype(f32)                                        # (2, 4)

    return w_in_t, w_hid, w_out_t, b_hid, epi


# ---------------------------------------------------------------------------
# Forward wrapper
# ---------------------------------------------------------------------------
def pi_ann_forward(Y, packed_params, nLayers):
    """Matches pi_ann.forward: Y (..., 3) -> y (..., 2)."""
    w_in_t, w_hid, w_out_t, b_hid, epi = packed_params
    num_hidden = nLayers - 1
    H2 = w_in_t.shape[0]                                  # 2 * nNodes

    orig_lead = Y.shape[:-1]
    x = Y.reshape(-1, IN_DIM).astype(jnp.float32)
    N = x.shape[0]

    # --- waste-free tile / grid derivation ----------------------------------
    n_lane = _round_up(max(N, 1), LANE)
    grid = pl.cdiv(n_lane, TILE_N_MAX)
    if grid > 1:
        # multi-tile: force an even step count so v7x's two TensorCores split
        # the "parallel" axis evenly (harmless on single-TC v5e/v6e).
        grid = 2 * pl.cdiv(n_lane, 2 * TILE_N_MAX)
    tile_n = _round_up(pl.cdiv(n_lane, grid), LANE)
    n_pad = grid * tile_n

    # rows on lanes: (3, n_pad), pad fused into the single framing op.
    xT = jnp.pad(x.T, ((0, 0), (0, n_pad - N)))

    params = [w_in_t] + ([w_hid] if num_hidden > 0 else []) + [w_out_t, b_hid, epi]
    param_specs = [
        pl.BlockSpec(p.shape, lambda i, nd=p.ndim: (0,) * nd) for p in params
    ]
    param_bytes = 4 * sum(int(p.size) for p in params)

    # Explicit VMEM limit: covers v5e's 16 MiB scoped default at large tiles;
    # well under physical VMEM on every generation (incl. v7x's 64 MiB).
    per_tile_bytes = 4 * tile_n * (2 * 8 + 2 * 8 + 4 * H2)   # dbuf x/out + h temps
    vmem_limit = int(min(100 << 20, max(32 << 20, 2 * (per_tile_bytes + param_bytes))))

    cost = pl.CostEstimate(
        flops=2 * n_pad * (H2 * IN_DIM + num_hidden * H2 * H2 + OUT_DIM * H2),
        transcendentals=OUT_DIM * n_pad,
        bytes_accessed=4 * (IN_DIM + OUT_DIM) * n_pad + param_bytes,
    )

    kernel = make_pi_ann_kernel(num_hidden)

    out = pl.pallas_call(
        kernel,
        out_shape=jax.ShapeDtypeStruct((OUT_DIM, n_pad), jnp.float32),
        grid_spec=pltpu.PrefetchScalarGridSpec(
            num_scalar_prefetch=0,
            grid=(grid,),
            in_specs=[pl.BlockSpec((IN_DIM, tile_n), lambda i: (0, i))] + param_specs,
            out_specs=pl.BlockSpec((OUT_DIM, tile_n), lambda i: (0, i)),
        ),
        compiler_params=pltpu.CompilerParams(
            dimension_semantics=("parallel",),
            vmem_limit_bytes=vmem_limit,
        ),
        cost_estimate=cost,
    )(xT, *params)

    return out[:, :N].T.reshape(*orig_lead, OUT_DIM)


# ---------------------------------------------------------------------------
# Pure-JAX reference (per-head, un-fused) for correctness checking
# ---------------------------------------------------------------------------
def _ref_forward(Y, nu_params, prob_params, nLayers):
    num_hidden = nLayers - 1
    x = Y.reshape(-1, IN_DIM).astype(jnp.float32)

    def mlp(params):
        h = x @ params[0] + params[1]
        h = jnp.maximum(h, 0.0)
        for l in range(num_hidden):
            h = h @ params[2 + 2 * l] + params[3 + 2 * l]
            h = jnp.maximum(h, 0.0)
        return h @ params[2 + 2 * num_hidden] + params[3 + 2 * num_hidden]

    nu = NU_MAX * jnp.tanh(mlp(nu_params))
    prob = jax.nn.sigmoid(mlp(prob_params))
    y = jnp.concatenate([nu, prob], axis=-1)
    return y.reshape(*Y.shape[:-1], OUT_DIM)


if __name__ == "__main__":
    nNodes, nLayers = 32, 2

    key = jax.random.PRNGKey(0)
    k_y, k_y3, k_y4, k_nu, k_pr = jax.random.split(key, 5)

    nu_params = init_head_params(k_nu, nNodes, nLayers)
    prob_params = init_head_params(k_pr, nNodes, nLayers)
    packed = pack_pi_ann_params(nu_params, prob_params, nNodes, nLayers)

    # 3-D case (B, T, 3), as in the module's batched branch
    Y = jax.random.normal(k_y, (2, 4, IN_DIM), jnp.float32)
    y = pi_ann_forward(Y, packed, nLayers)
    jax.block_until_ready(y)

    # 2-D case (B, 3)
    Y2 = jax.random.normal(k_y, (2, IN_DIM), jnp.float32)
    y2 = pi_ann_forward(Y2, packed, nLayers)
    jax.block_until_ready(y2)

    # moderate batch: exercises waste-free single-tile path (640 cols, not 1024)
    Y3 = jax.random.normal(k_y3, (2, 600, IN_DIM), jnp.float32)
    y3 = pi_ann_forward(Y3, packed, nLayers)
    jax.block_until_ready(y3)

    # larger batch: exercises the even multi-step grid (2 tiles) path
    Y4 = jax.random.normal(k_y4, (2, 4500, IN_DIM), jnp.float32)
    y4 = pi_ann_forward(Y4, packed, nLayers)
    jax.block_until_ready(y4)

    # correctness vs pure-JAX reference
    ref = _ref_forward(Y, nu_params, prob_params, nLayers)
    ref2 = _ref_forward(Y2, nu_params, prob_params, nLayers)
    ref3 = _ref_forward(Y3, nu_params, prob_params, nLayers)
    ref4 = _ref_forward(Y4, nu_params, prob_params, nLayers)
    assert y.shape == (2, 4, 2) and y2.shape == (2, 2)
    assert y3.shape == (2, 600, 2) and y4.shape == (2, 4500, 2)
    assert jnp.allclose(y, ref, atol=2e-4), "3D mismatch"
    assert jnp.allclose(y2, ref2, atol=2e-4), "2D mismatch"
    assert jnp.allclose(y3, ref3, atol=2e-4), "moderate-batch mismatch"
    assert jnp.allclose(y4, ref4, atol=2e-4), "multi-tile mismatch"

    print("KERNEL_OK")
</pallas_src>

<mosaic_0001>
module attributes {stable_mosaic.version = 11 : i64} {
  func.func @kernel(%arg0: i32, %arg1: memref<3x128xf32, #tpu.memory_space<vmem>>, %arg2: memref<64x3xf32, #tpu.memory_space<vmem>>, %arg3: memref<1x64x64xf32, #tpu.memory_space<vmem>>, %arg4: memref<2x64xf32, #tpu.memory_space<vmem>>, %arg5: memref<64x2xf32, #tpu.memory_space<vmem>>, %arg6: memref<2x4xf32, #tpu.memory_space<vmem>>, %arg7: memref<2x128xf32, #tpu.memory_space<vmem>>) attributes {dimension_semantics = [#tpu.dimension_semantics<parallel>], iteration_bounds = array<i64: 1>, scalar_prefetch = 0 : i64, scratch_operands = 0 : i64, tpu.core_type = #tpu.core_type<tc>, window_params = [{transform_indices = @transform_0, window_bounds = array<i64: 3, 128>}, {pipeline_mode = #tpu.pipeline_mode<synchronous>, transform_indices = @transform_1, window_bounds = array<i64: 64, 3>}, {pipeline_mode = #tpu.pipeline_mode<synchronous>, transform_indices = @transform_2, window_bounds = array<i64: 1, 64, 64>}, {pipeline_mode = #tpu.pipeline_mode<synchronous>, transform_indices = @transform_3, window_bounds = array<i64: 2, 64>}, {pipeline_mode = #tpu.pipeline_mode<synchronous>, transform_indices = @transform_4, window_bounds = array<i64: 64, 2>}, {pipeline_mode = #tpu.pipeline_mode<synchronous>, transform_indices = @transform_5, window_bounds = array<i64: 2, 4>}, {transform_indices = @transform_6, window_bounds = array<i64: 2, 128>}]} {
    %c0 = arith.constant 0 : index
    %c0_0 = arith.constant 0 : index
    %0 = vector.load %arg1[%c0, %c0_0] : memref<3x128xf32, #tpu.memory_space<vmem>>, vector<3x128xf32>
    %c0_1 = arith.constant 0 : index
    %c0_2 = arith.constant 0 : index
    %1 = vector.load %arg2[%c0_1, %c0_2] : memref<64x3xf32, #tpu.memory_space<vmem>>, vector<64x3xf32>
    %2 = vector.extract_strided_slice %1 {offsets = [0, 0], sizes = [64, 1], strides = [1, 1]} : vector<64x3xf32> to vector<64x1xf32>
    %3 = vector.extract_strided_slice %0 {offsets = [0, 0], sizes = [1, 128], strides = [1, 1]} : vector<3x128xf32> to vector<1x128xf32>
    %4 = vector.broadcast %2 : vector<64x1xf32> to vector<64x128xf32>
    %5 = vector.broadcast %3 : vector<1x128xf32> to vector<64x128xf32>
    %6 = arith.mulf %4, %5 : vector<64x128xf32>
    %7 = vector.extract_strided_slice %1 {offsets = [0, 1], sizes = [64, 1], strides = [1, 1]} : vector<64x3xf32> to vector<64x1xf32>
    %8 = vector.extract_strided_slice %0 {offsets = [1, 0], sizes = [1, 128], strides = [1, 1]} : vector<3x128xf32> to vector<1x128xf32>
    %9 = vector.broadcast %7 : vector<64x1xf32> to vector<64x128xf32>
    %10 = vector.broadcast %8 : vector<1x128xf32> to vector<64x128xf32>
    %11 = arith.mulf %9, %10 : vector<64x128xf32>
    %12 = arith.addf %6, %11 : vector<64x128xf32>
    %13 = vector.extract_strided_slice %1 {offsets = [0, 2], sizes = [64, 1], strides = [1, 1]} : vector<64x3xf32> to vector<64x1xf32>
    %14 = vector.extract_strided_slice %0 {offsets = [2, 0], sizes = [1, 128], strides = [1, 1]} : vector<3x128xf32> to vector<1x128xf32>
    %15 = vector.broadcast %13 : vector<64x1xf32> to vector<64x128xf32>
    %16 = vector.broadcast %14 : vector<1x128xf32> to vector<64x128xf32>
    %17 = arith.mulf %15, %16 : vector<64x128xf32>
    %18 = arith.addf %12, %17 : vector<64x128xf32>
    %c0_3 = arith.constant 0 : index
    %c0_4 = arith.constant 0 : index
    %19 = vector.load %arg5[%c0_3, %c0_4] : memref<64x2xf32, #tpu.memory_space<vmem>>, vector<64x1xf32>
    %20 = vector.broadcast %19 : vector<64x1xf32> to vector<64x128xf32>
    %21 = arith.addf %18, %20 : vector<64x128xf32>
    %cst = arith.constant 0.000000e+00 : f32
    %22 = vector.broadcast %cst : f32 to vector<64x128xf32>
    %23 = arith.maximumf %21, %22 : vector<64x128xf32>
    %c0_5 = arith.constant 0 : index
    %c0_6 = arith.constant 0 : index
    %c0_7 = arith.constant 0 : index
    %24 = vector.load %arg3[%c0_5, %c0_6, %c0_7] : memref<1x64x64xf32, #tpu.memory_space<vmem>>, vector<1x64x64xf32>
    %25 = vector.shape_cast %24 : vector<1x64x64xf32> to vector<64x64xf32>
    %cst_8 = arith.constant dense<0.000000e+00> : vector<64x128xf32>
    %26 = tpu.matmul %25, %23, %cst_8 {dimension_numbers = #tpu.dot_dimension_numbers<[1], [0], [0], [1], [0, 0, 1, 1], [], []>} : vector<64x64xf32>, vector<64x128xf32>, vector<64x128xf32> -> vector<64x128xf32>
    %c0_9 = arith.constant 0 : index
    %c1 = arith.constant 1 : index
    %27 = vector.load %arg5[%c0_9, %c1] : memref<64x2xf32, #tpu.memory_space<vmem>>, vector<64x1xf32>
    %28 = vector.broadcast %27 : vector<64x1xf32> to vector<64x128xf32>
    %29 = arith.addf %26, %28 : vector<64x128xf32>
    %cst_10 = arith.constant 0.000000e+00 : f32
    %30 = vector.broadcast %cst_10 : f32 to vector<64x128xf32>
    %31 = arith.maximumf %29, %30 : vector<64x128xf32>
    %c0_11 = arith.constant 0 : index
    %c0_12 = arith.constant 0 : index
    %32 = vector.load %arg4[%c0_11, %c0_12] : memref<2x64xf32, #tpu.memory_space<vmem>>, vector<2x64xf32>
    %cst_13 = arith.constant dense<0.000000e+00> : vector<2x128xf32>
    %33 = tpu.matmul %32, %31, %cst_13 {dimension_numbers = #tpu.dot_dimension_numbers<[1], [0], [0], [1], [0, 0, 1, 1], [], []>} : vector<2x64xf32>, vector<64x128xf32>, vector<2x128xf32> -> vector<2x128xf32>
    %c0_14 = arith.constant 0 : index
    %c0_15 = arith.constant 0 : index
    %34 = vector.load %arg6[%c0_14, %c0_15] : memref<2x4xf32, #tpu.memory_space<vmem>>, vector<2x1xf32>
    %35 = vector.broadcast %34 : vector<2x1xf32> to vector<2x128xf32>
    %36 = arith.addf %33, %35 : vector<2x128xf32>
    %c0_16 = arith.constant 0 : index
    %c1_17 = arith.constant 1 : index
    %37 = vector.load %arg6[%c0_16, %c1_17] : memref<2x4xf32, #tpu.memory_space<vmem>>, vector<2x1xf32>
    %38 = vector.broadcast %37 : vector<2x1xf32> to vector<2x128xf32>
    %39 = arith.mulf %36, %38 : vector<2x128xf32>
    %c0_18 = arith.constant 0 : index
    %c2 = arith.constant 2 : index
    %40 = vector.load %arg6[%c0_18, %c2] : memref<2x4xf32, #tpu.memory_space<vmem>>, vector<2x1xf32>
    %41 = math.tanh %39 : vector<2x128xf32>
    %42 = vector.broadcast %40 : vector<2x1xf32> to vector<2x128xf32>
    %43 = arith.mulf %42, %41 : vector<2x128xf32>
    %c0_19 = arith.constant 0 : index
    %c3 = arith.constant 3 : index
    %44 = vector.load %arg6[%c0_19, %c3] : memref<2x4xf32, #tpu.memory_space<vmem>>, vector<2x1xf32>
    %45 = vector.broadcast %44 : vector<2x1xf32> to vector<2x128xf32>
    %46 = arith.addf %43, %45 : vector<2x128xf32>
    %c0_20 = arith.constant 0 : index
    %c0_21 = arith.constant 0 : index
    %47 = vector.load %arg7[%c0_20, %c0_21] : memref<2x128xf32, #tpu.memory_space<vmem>>, vector<2x128xf32>
    tpu.vector_store %arg7[%c0_20, %c0_21], %46 {strides = array<i32>} : memref<2x128xf32, #tpu.memory_space<vmem>>, vector<2x128xf32>,
    return
  }
  func.func @transform_0(%arg0: i32) -> (i32, i32) {
    %c0_i32 = arith.constant 0 : i32
    %c0_i32_0 = arith.constant 0 : i32
    return %c0_i32, %arg0 : i32, i32
  }
  func.func @transform_1(%arg0: i32) -> (i32, i32) {
    %c0_i32 = arith.constant 0 : i32
    %c0_i32_0 = arith.constant 0 : i32
    %c0_i32_1 = arith.constant 0 : i32
    return %c0_i32, %c0_i32_0 : i32, i32
  }
  func.func @transform_2(%arg0: i32) -> (i32, i32, i32) {
    %c0_i32 = arith.constant 0 : i32
    %c0_i32_0 = arith.constant 0 : i32
    %c0_i32_1 = arith.constant 0 : i32
    %c0_i32_2 = arith.constant 0 : i32
    return %c0_i32, %c0_i32_0, %c0_i32_1 : i32, i32, i32
  }
  func.func @transform_3(%arg0: i32) -> (i32, i32) {
    %c0_i32 = arith.constant 0 : i32
    %c0_i32_0 = arith.constant 0 : i32
    %c0_i32_1 = arith.constant 0 : i32
    return %c0_i32, %c0_i32_0 : i32, i32
  }
  func.func @transform_4(%arg0: i32) -> (i32, i32) {
    %c0_i32 = arith.constant 0 : i32
    %c0_i32_0 = arith.constant 0 : i32
    %c0_i32_1 = arith.constant 0 : i32
    return %c0_i32, %c0_i32_0 : i32, i32
  }
  func.func @transform_5(%arg0: i32) -> (i32, i32) {
    %c0_i32 = arith.constant 0 : i32
    %c0_i32_0 = arith.constant 0 : i32
    %c0_i32_1 = arith.constant 0 : i32
    return %c0_i32, %c0_i32_0 : i32, i32
  }
  func.func @transform_6(%arg0: i32) -> (i32, i32) {
    %c0_i32 = arith.constant 0 : i32
    %c0_i32_0 = arith.constant 0 : i32
    return %c0_i32, %arg0 : i32, i32
  }
}

</mosaic_0001>

<llo_original>
// kernel: tpu_custom_call.1
$region0: #{tpu_custom_call.1}
  #allocation0 [shape = 'u32[]', space=smem, size = 0x4, offset = 0x4, fixed_abs, tag = 'smem constant byte address 0x4 - core index']
  #allocation1 [shape = 'u32[72,128]{1,0:T(1,128)}', space=vmem, size = 0x9000, scoped, tag = 'internal scratch']
  %s0 = inlined_call_operand.vmem [shape: f32[3,128], index: 0, kind: input, shape index: {}]
  %s1 = inlined_call_operand.vmem [shape: f32[64,3], index: 1, kind: input, shape index: {}]
  %s2 = inlined_call_operand.vmem [shape: f32[1,64,64], index: 2, kind: input, shape index: {}]
  %s3 = inlined_call_operand.vmem [shape: f32[2,64], index: 3, kind: input, shape index: {}]
  %s4 = inlined_call_operand.vmem [shape: f32[64,2], index: 4, kind: input, shape index: {}]
  %s5 = inlined_call_operand.vmem [shape: f32[2,4], index: 5, kind: input, shape index: {}]
  %s6 = inlined_call_operand.hbm [shape: f32[2,128], index: 6, kind: output, shape index: {}]
  %s7 = sld [smem:[#allocation0]]
  $region34: #{tpu_custom_call.1} parent=0
    _
  %s9 = ssub.s32 1, %s7
  %s10 = scalar_select 0, %s9, %s7
  $region1: #{tpu_custom_call.1} parent=0
    #allocation2 [shape = 'u8[1024]{0}', space=vmem, size = 0x400, scoped, tag = 'output window, operand 0, single buffered']
    #allocation3 [shape = 's32[1]{0}', space=sflag, size = 0x4, scoped, tag = 'scoped memory for tpu_custom_call.1']
    %11 = vsyncpa [#allocation3], 0
    // Predicated region
    $region2: #{tpu_custom_call.1} parent=1 // pred_check
      _
    $region3: #{tpu_custom_call.1} parent=1 // pred_check_branch
      %13 = sbr.rel (0) target = $region5
    $region4: #{tpu_custom_call.1} parent=1 // pred_region
      _
    $region5: #{tpu_custom_call.1} parent=1 // pred_fallthru
      _
    // Predicated region
    $region6: #{tpu_custom_call.1} parent=1 // pred_check
      _
    $region7: #{tpu_custom_call.1} parent=1 // pred_check_branch
      %15 = sbr.rel (0) target = $region9
    $region8: #{tpu_custom_call.1} parent=1 // pred_region
      _
    $region9: #{tpu_custom_call.1} parent=1 // pred_fallthru
      _
    // Predicated region
    $region10: #{tpu_custom_call.1} parent=1 // pred_check
      _
    $region11: #{tpu_custom_call.1} parent=1 // pred_check_branch
      %17 = sbr.rel (0) target = $region13
    $region12: #{tpu_custom_call.1} parent=1 // pred_region
      _
    $region13: #{tpu_custom_call.1} parent=1 // pred_fallthru
      _
    // Predicated region
    $region14: #{tpu_custom_call.1} parent=1 // pred_check
      _
    $region15: #{tpu_custom_call.1} parent=1 // pred_check_branch
      %19 = sbr.rel (0) target = $region17
    $region16: #{tpu_custom_call.1} parent=1 // pred_region
      _
    $region17: #{tpu_custom_call.1} parent=1 // pred_fallthru
      _
    // Predicated region
    $region18: #{tpu_custom_call.1} parent=1 // pred_check
      _
    $region19: #{tpu_custom_call.1} parent=1 // pred_check_branch
      %21 = sbr.rel (0) target = $region21
    $region20: #{tpu_custom_call.1} parent=1 // pred_region
      _
    $region21: #{tpu_custom_call.1} parent=1 // pred_fallthru
      _
    // Predicated region
    $region22: #{tpu_custom_call.1} parent=1 // pred_check
      _
    $region23: #{tpu_custom_call.1} parent=1 // pred_check_branch
      %23 = sbr.rel (0) target = $region25
    $region24: #{tpu_custom_call.1} parent=1 // pred_region
      _
    $region25: #{tpu_custom_call.1} parent=1 // pred_fallthru
      _
    %v24 = vld [vmem:[%s0] sm:$0x7]
    %v25 = vld [vmem:[%s1] sm:$0xff]
    %v26 = vld [vmem:[%s1 + $0x8] sm:$0xff]
    %v27 = vld [vmem:[%s1 + $0x10] sm:$0xff]
    %v28 = vld [vmem:[%s1 + $0x18] sm:$0xff]
    %v29 = vld [vmem:[%s1 + $0x20] sm:$0xff]
    %v30 = vld [vmem:[%s1 + $0x28] sm:$0xff]
    %v31 = vld [vmem:[%s1 + $0x30] sm:$0xff]
    %v32 = vld [vmem:[%s1 + $0x38] sm:$0xff]
    %34 = vset.pattern.permute.xlu0 0
    %35 = vperm.xlu0 %34, %v25
    %v36 = vpop.permute.xlu0 %35
    %39 = vset.pattern.permute.xlu0 0
    %40 = vperm.xlu0 %39, %v26
    %v41 = vpop.permute.xlu0 %40
    %44 = vset.pattern.permute.xlu0 0
    %45 = vperm.xlu0 %44, %v27
    %v46 = vpop.permute.xlu0 %45
    %49 = vset.pattern.permute.xlu0 0
    %50 = vperm.xlu0 %49, %v28
    %v51 = vpop.permute.xlu0 %50
    %54 = vset.pattern.permute.xlu0 0
    %55 = vperm.xlu0 %54, %v29
    %v56 = vpop.permute.xlu0 %55
    %59 = vset.pattern.permute.xlu0 0
    %60 = vperm.xlu0 %59, %v30
    %v61 = vpop.permute.xlu0 %60
    %64 = vset.pattern.permute.xlu0 0
    %65 = vperm.xlu0 %64, %v31
    %v66 = vpop.permute.xlu0 %65
    %69 = vset.pattern.permute.xlu0 0
    %70 = vperm.xlu0 %69, %v32
    %v71 = vpop.permute.xlu0 %70
    %v73 = vperm.slane %v24, 0
    %v74 = vmul.f32 %v36, %v73
    %v75 = vmul.f32 %v41, %v73
    %v76 = vmul.f32 %v46, %v73
    %v77 = vmul.f32 %v51, %v73
    %v78 = vmul.f32 %v56, %v73
    %v79 = vmul.f32 %v61, %v73
    %v80 = vmul.f32 %v66, %v73
    %v81 = vmul.f32 %v71, %v73
    %82 = vset.pattern.permute.xlu0 1
    %83 = vperm.xlu0 %82, %v25
    %v84 = vpop.permute.xlu0 %83
    %86 = vset.pattern.permute.xlu0 1
    %87 = vperm.xlu0 %86, %v26
    %v88 = vpop.permute.xlu0 %87
    %90 = vset.pattern.permute.xlu0 1
    %91 = vperm.xlu0 %90, %v27
    %v92 = vpop.permute.xlu0 %91
    %94 = vset.pattern.permute.xlu0 1
    %95 = vperm.xlu0 %94, %v28
    %v96 = vpop.permute.xlu0 %95
    %98 = vset.pattern.permute.xlu0 1
    %99 = vperm.xlu0 %98, %v29
    %v100 = vpop.permute.xlu0 %99
    %102 = vset.pattern.permute.xlu0 1
    %103 = vperm.xlu0 %102, %v30
    %v104 = vpop.permute.xlu0 %103
    %106 = vset.pattern.permute.xlu0 1
    %107 = vperm.xlu0 %106, %v31
    %v108 = vpop.permute.xlu0 %107
    %110 = vset.pattern.permute.xlu0 1
    %111 = vperm.xlu0 %110, %v32
    %v112 = vpop.permute.xlu0 %111
    %v114 = vperm.slane %v24, 1
    %v115 = vmul.f32 %v84, %v114
    %v116 = vmul.f32 %v88, %v114
    %v117 = vmul.f32 %v92, %v114
    %v118 = vmul.f32 %v96, %v114
    %v119 = vmul.f32 %v100, %v114
    %v120 = vmul.f32 %v104, %v114
    %v121 = vmul.f32 %v108, %v114
    %v122 = vmul.f32 %v112, %v114
    %v123 = vadd.f32 %v74, %v115
    %v124 = vadd.f32 %v75, %v116
    %v125 = vadd.f32 %v76, %v117
    %v126 = vadd.f32 %v77, %v118
    %v127 = vadd.f32 %v78, %v119
    %v128 = vadd.f32 %v79, %v120
    %v129 = vadd.f32 %v80, %v121
    %v130 = vadd.f32 %v81, %v122
    %131 = vset.pattern.permute.xlu0 2
    %132 = vperm.xlu0 %131, %v25
    %v133 = vpop.permute.xlu0 %132
    %135 = vset.pattern.permute.xlu0 2
    %136 = vperm.xlu0 %135, %v26
    %v137 = vpop.permute.xlu0 %136
    %139 = vset.pattern.permute.xlu0 2
    %140 = vperm.xlu0 %139, %v27
    %v141 = vpop.permute.xlu0 %140
    %143 = vset.pattern.permute.xlu0 2
    %144 = vperm.xlu0 %143, %v28
    %v145 = vpop.permute.xlu0 %144
    %147 = vset.pattern.permute.xlu0 2
    %148 = vperm.xlu0 %147, %v29
    %v149 = vpop.permute.xlu0 %148
    %151 = vset.pattern.permute.xlu0 2
    %152 = vperm.xlu0 %151, %v30
    %v153 = vpop.permute.xlu0 %152
    %155 = vset.pattern.permute.xlu0 2
    %156 = vperm.xlu0 %155, %v31
    %v157 = vpop.permute.xlu0 %156
    %159 = vset.pattern.permute.xlu0 2
    %160 = vperm.xlu0 %159, %v32
    %v161 = vpop.permute.xlu0 %160
    %v163 = vperm.slane %v24, 2
    %v164 = vmul.f32 %v133, %v163
    %v165 = vmul.f32 %v137, %v163
    %v166 = vmul.f32 %v141, %v163
    %v167 = vmul.f32 %v145, %v163
    %v168 = vmul.f32 %v149, %v163
    %v169 = vmul.f32 %v153, %v163
    %v170 = vmul.f32 %v157, %v163
    %v171 = vmul.f32 %v161, %v163
    %v172 = vadd.f32 %v123, %v164
    %v173 = vadd.f32 %v124, %v165
    %v174 = vadd.f32 %v125, %v166
    %v175 = vadd.f32 %v126, %v167
    %v176 = vadd.f32 %v127, %v168
    %v177 = vadd.f32 %v128, %v169
    %v178 = vadd.f32 %v129, %v170
    %v179 = vadd.f32 %v130, %v171
    %v180 = vld [vmem:[%s4] sm:$0xff]
    %v181 = vld [vmem:[%s4 + $0x8] sm:$0xff]
    %v182 = vld [vmem:[%s4 + $0x10] sm:$0xff]
    %v183 = vld [vmem:[%s4 + $0x18] sm:$0xff]
    %v184 = vld [vmem:[%s4 + $0x20] sm:$0xff]
    %v185 = vld [vmem:[%s4 + $0x28] sm:$0xff]
    %v186 = vld [vmem:[%s4 + $0x30] sm:$0xff]
    %v187 = vld [vmem:[%s4 + $0x38] sm:$0xff]
    %189 = vset.pattern.permute.xlu0 0
    %190 = vperm.xlu0 %189, %v180
    %v191 = vpop.permute.xlu0 %190
    %194 = vset.pattern.permute.xlu0 0
    %195 = vperm.xlu0 %194, %v181
    %v196 = vpop.permute.xlu0 %195
    %199 = vset.pattern.permute.xlu0 0
    %200 = vperm.xlu0 %199, %v182
    %v201 = vpop.permute.xlu0 %200
    %204 = vset.pattern.permute.xlu0 0
    %205 = vperm.xlu0 %204, %v183
    %v206 = vpop.permute.xlu0 %205
    %209 = vset.pattern.permute.xlu0 0
    %210 = vperm.xlu0 %209, %v184
    %v211 = vpop.permute.xlu0 %210
    %214 = vset.pattern.permute.xlu0 0
    %215 = vperm.xlu0 %214, %v185
    %v216 = vpop.permute.xlu0 %215
    %219 = vset.pattern.permute.xlu0 0
    %220 = vperm.xlu0 %219, %v186
    %v221 = vpop.permute.xlu0 %220
    %224 = vset.pattern.permute.xlu0 0
    %225 = vperm.xlu0 %224, %v187
    %v226 = vpop.permute.xlu0 %225
    %v228 = vadd.f32 %v172, %v191
    %v229 = vadd.f32 %v173, %v196
    %v230 = vadd.f32 %v174, %v201
    %v231 = vadd.f32 %v175, %v206
    %v232 = vadd.f32 %v176, %v211
    %v233 = vadd.f32 %v177, %v216
    %v234 = vadd.f32 %v178, %v221
    %v235 = vadd.f32 %v179, %v226
    %v236 = vmax.f32 %v228, 0.0
    %v237 = vmax.f32 %v229, 0.0
    %v238 = vmax.f32 %v230, 0.0
    %v239 = vmax.f32 %v231, 0.0
    %v240 = vmax.f32 %v232, 0.0
    %v241 = vmax.f32 %v233, 0.0
    %v242 = vmax.f32 %v234, 0.0
    %v243 = vmax.f32 %v235, 0.0
    %v244 = vld [vmem:[%s2] sm:$0xff]
    %v245 = vld [vmem:[%s2 + $0x8] sm:$0xff]
    %v246 = vld [vmem:[%s2 + $0x10] sm:$0xff]
    %v247 = vld [vmem:[%s2 + $0x18] sm:$0xff]
    %v248 = vld [vmem:[%s2 + $0x20] sm:$0xff]
    %v249 = vld [vmem:[%s2 + $0x28] sm:$0xff]
    %v250 = vld [vmem:[%s2 + $0x30] sm:$0xff]
    %v251 = vld [vmem:[%s2 + $0x38] sm:$0xff]
    %252 = vset.pattern.permute.xlu0 1
    %253 = vperm.xlu0 %252, %v180
    %v254 = vpop.permute.xlu0 %253
    %256 = vset.pattern.permute.xlu0 1
    %257 = vperm.xlu0 %256, %v181
    %v258 = vpop.permute.xlu0 %257
    %260 = vset.pattern.permute.xlu0 1
    %261 = vperm.xlu0 %260, %v182
    %v262 = vpop.permute.xlu0 %261
    %264 = vset.pattern.permute.xlu0 1
    %265 = vperm.xlu0 %264, %v183
    %v266 = vpop.permute.xlu0 %265
    %268 = vset.pattern.permute.xlu0 1
    %269 = vperm.xlu0 %268, %v184
    %v270 = vpop.permute.xlu0 %269
    %272 = vset.pattern.permute.xlu0 1
    %273 = vperm.xlu0 %272, %v185
    %v274 = vpop.permute.xlu0 %273
    %276 = vset.pattern.permute.xlu0 1
    %277 = vperm.xlu0 %276, %v186
    %v278 = vpop.permute.xlu0 %277
    %280 = vset.pattern.permute.xlu0 1
    %281 = vperm.xlu0 %280, %v187
    %v282 = vpop.permute.xlu0 %281
    %vm284 = vcmask 523264
    %v286 = vsel %vm284, %v244, 0
    %v289 = vsel %vm284, %v245, 0
    %v292 = vsel %vm284, %v246, 0
    %v295 = vsel %vm284, %v247, 0
    %v298 = vsel %vm284, %v248, 0
    %v301 = vsel %vm284, %v249, 0
    %v304 = vsel %vm284, %v250, 0
    %v307 = vsel %vm284, %v251, 0
    %309 = vmatpush.msra.mxu0 0.0
    %310 = vmatpush.msra.mxu0 0.0
    %311 = vmatpush.msra.mxu0 0.0
    %312 = vmatpush.msra.mxu0 0.0
    %313 = vmatpush.msra.mxu0 0.0
    %314 = vmatpush.msra.mxu0 0.0
    %315 = vmatpush.msra.mxu0 0.0
    %316 = vmatpush.msra.mxu0 0.0
    %317 = vmatpush.msra.mxu0 %v243
    %318 = vmatpush.msra.mxu0 %v242
    %319 = vmatpush.msra.mxu0 %v241
    %320 = vmatpush.msra.mxu0 %v240
    %321 = vmatpush.msra.mxu0 %v239
    %322 = vmatpush.msra.mxu0 %v238
    %323 = vmatpush.msra.mxu0 %v237
    %324 = vmatpush.msra.mxu0 %v236
    %325 = vmatmul.f32.gmra.mxu0 %v286
    %v326 = vpop.f32.mrf.mxu0
    %v327 = vadd.f32 %v254, %v326
    %328 = vmatmul.f32.gmra.mxu0 %v289
    %v329 = vpop.f32.mrf.mxu0
    %v330 = vadd.f32 %v258, %v329
    %331 = vmatmul.f32.gmra.mxu0 %v292
    %v332 = vpop.f32.mrf.mxu0
    %v333 = vadd.f32 %v262, %v332
    %334 = vmatmul.f32.gmra.mxu0 %v295
    %v335 = vpop.f32.mrf.mxu0
    %v336 = vadd.f32 %v266, %v335
    %337 = vmatmul.f32.gmra.mxu0 %v298
    %v338 = vpop.f32.mrf.mxu0
    %v339 = vadd.f32 %v270, %v338
    %340 = vmatmul.f32.gmra.mxu0 %v301
    %v341 = vpop.f32.mrf.mxu0
    %v342 = vadd.f32 %v274, %v341
    %343 = vmatmul.f32.gmra.mxu0 %v304
    %v344 = vpop.f32.mrf.mxu0
    %v345 = vadd.f32 %v278, %v344
    %346 = vmatmul.f32.gmra.mxu0 %v307
    %v347 = vpop.f32.mrf.mxu0
    %v348 = vadd.f32 %v282, %v347
    %349 = vdwg.mxu0
    %v350 = vmax.f32 %v327, 0.0
    %v351 = vmax.f32 %v330, 0.0
    %v352 = vmax.f32 %v333, 0.0
    %v353 = vmax.f32 %v336, 0.0
    %v354 = vmax.f32 %v339, 0.0
    %v355 = vmax.f32 %v342, 0.0
    %v356 = vmax.f32 %v345, 0.0
    %v357 = vmax.f32 %v348, 0.0
    %v358 = vld [vmem:[%s3] sm:$0x3]
    %v359 = vld [vmem:[%s5] sm:$0x3]
    %361 = vset.pattern.permute.xlu0 0
    %362 = vperm.xlu0 %361, %v359
    %v363 = vpop.permute.xlu0 %362
    %v366 = vsel %vm284, %v358, 0
    %368 = vmatpush.msra.mxu0 0.0
    %369 = vmatpush.msra.mxu0 0.0
    %370 = vmatpush.msra.mxu0 0.0
    %371 = vmatpush.msra.mxu0 0.0
    %372 = vmatpush.msra.mxu0 0.0
    %373 = vmatpush.msra.mxu0 0.0
    %374 = vmatpush.msra.mxu0 0.0
    %375 = vmatpush.msra.mxu0 0.0
    %376 = vmatpush.msra.mxu0 %v357
    %377 = vmatpush.msra.mxu0 %v356
    %378 = vmatpush.msra.mxu0 %v355
    %379 = vmatpush.msra.mxu0 %v354
    %380 = vmatpush.msra.mxu0 %v353
    %381 = vmatpush.msra.mxu0 %v352
    %382 = vmatpush.msra.mxu0 %v351
    %383 = vmatpush.msra.mxu0 %v350
    %384 = vmatmul.f32.gmra.mxu0 %v366
    %v385 = vpop.f32.mrf.mxu0
    %v386 = vadd.f32 %v363, %v385
    %387 = vdwg.mxu0
    %388 = vset.pattern.permute.xlu0 1
    %389 = vperm.xlu0 %388, %v359
    %v390 = vpop.permute.xlu0 %389
    %v392 = vmul.f32 %v386, %v390
    %v393 = vtanh.pop %v392
    %394 = vset.pattern.permute.xlu0 2
    %395 = vperm.xlu0 %394, %v359
    %v396 = vpop.permute.xlu0 %395
    %v398 = vmul.f32 %v396, %v393
    %399 = vset.pattern.permute.xlu0 3
    %400 = vperm.xlu0 %399, %v359
    %v401 = vpop.permute.xlu0 %400
    %v403 = vadd.f32 %v398, %v401
    %404 = vst [vmem:[#allocation2] sm:$0x3] %v403
    // Predicated region
    $region26: #{tpu_custom_call.1} parent=1 // pred_check
      _
    $region27: #{tpu_custom_call.1} parent=1 // pred_check_branch
      %406 = sbr.rel (0) target = $region29
    $region28: #{tpu_custom_call.1} parent=1 // pred_region
      %408 = vsyncadd [#allocation3], 0
      %s410 = sshll.u32 [#allocation2], 4
      %s411 = int_to_ptr.vmem [resolvable:$true] %s410
      %s412 = sshll.u32 %s6, 4
      %s413 = int_to_ptr.hbm [resolvable:$true] %s412
      %415 = dma.vmem_to_hbm [thread:$0]  %s411, 32, %s413, [#allocation3]
    $region29: #{tpu_custom_call.1} parent=1 // pred_fallthru
      _
    // Predicated region
    $region30: #{tpu_custom_call.1} parent=1 // pred_check
      _
    $region31: #{tpu_custom_call.1} parent=1 // pred_check_branch
      %417 = sbr.rel (0) target = $region33
    $region32: #{tpu_custom_call.1} parent=1 // pred_region
      %419 = dma.done [#allocation3], 32
    $region33: #{tpu_custom_call.1} parent=1 // pred_fallthru
      _
    %420 = vsyncpa [#allocation3], 1

</llo_original>
